<compile_context>
chip_gen: v5e
topology: v5e:2x2
jax: 0.10.0
libtpu: 0.0.40
codegen_flags: <defaults>
</compile_context>

<pallas_src>
import jax
import jax.numpy as jnp
from jax import lax
from jax.experimental import pallas as pl
from jax.experimental.pallas import tpu as pltpu

THRESHOLD = 0.5  # BrainCog IFNode default threshold

# layout: all tensors are row-major 2-D, batch-major.
#   x  : (B, n_in)   input spikes
#   x1 : (B, n_out)  feedback state (zeros on first call, B == 1 in the module)
#   w1 : (n_in,  n_h), w2 : (n_h, n_out), w3 : (n_out, n_h)
#   (weights stored as (in_features, out_features) so CustomLinear == x @ W,
#    exactly like torch's x.matmul(self.weight))

# dot_general dimension_numbers that contract the batch (leading) axis of both
# operands: result[i, j] = sum_b a[b, i] * b[b, j]  ==  a^T @ b, but without
# materializing a transpose (lowers to the MXU's transposed-LHS matmul path).
_BATCH_CONTRACT = (((0,), (0,)), ((), ()))


def feedback_kernel(x_ref, x1_ref, w1_ref, w2_ref, w3_ref,
                    x1_out_ref, dw1_ref, dw3_ref, dw2_ref):
    x = x_ref[...]
    x1 = x1_ref[...]
    w1 = w1_ref[...]
    w2 = w2_ref[...]
    w3 = w3_ref[...]

    # ---- stdp[0]: MutliInputSTDP(IFNode, [CustomLinear(w1), CustomLinear(w3)]) ----
    i0 = (jnp.dot(x, w1, preferred_element_type=jnp.float32)
          + jnp.dot(x1, w3, preferred_element_type=jnp.float32))
    # IFNode with fresh membrane: mem = i0, spike = heaviside(mem - threshold)
    s0 = (i0 >= THRESHOLD).astype(jnp.float32)
    # dw via autograd.grad(i, w, grad_outputs=s) with inputs replaced by trace;
    # first call => trace == input, so dw = input^T @ spike.  Contract the
    # batch axis directly — no explicit .T / XLU transpose.
    dw1_ref[...] = lax.dot_general(x, s0, _BATCH_CONTRACT,
                                   preferred_element_type=jnp.float32)
    dw3_ref[...] = lax.dot_general(x1, s0, _BATCH_CONTRACT,
                                   preferred_element_type=jnp.float32)

    # ---- stdp[1]: STDP(IFNode, CustomLinear(w2)) ----
    i1 = jnp.dot(s0, w2, preferred_element_type=jnp.float32)
    s1 = (i1 >= THRESHOLD).astype(jnp.float32)
    dw2_ref[...] = lax.dot_general(s0, s1, _BATCH_CONTRACT,
                                   preferred_element_type=jnp.float32)

    x1_out_ref[...] = s1  # new self.x1


def feedback_forward(x, x1, w1, w2, w3):
    B, n_in = x.shape
    _, n_h = w1.shape
    _, n_out = w2.shape

    # Whole-array VMEM residency; no grid -> no per-step pipeline overhead.
    vmem = pl.BlockSpec(memory_space=pltpu.MemorySpace.VMEM)

    x1_new, dw_w1, dw_w3, dw_w2 = pl.pallas_call(
        feedback_kernel,
        in_specs=[vmem, vmem, vmem, vmem, vmem],
        out_specs=(vmem, vmem, vmem, vmem),
        out_shape=(jax.ShapeDtypeStruct((B, n_out), jnp.float32),
                   jax.ShapeDtypeStruct((n_in, n_h), jnp.float32),
                   jax.ShapeDtypeStruct((n_out, n_h), jnp.float32),
                   jax.ShapeDtypeStruct((n_h, n_out), jnp.float32)),
    )(x, x1, w1, w2, w3)

    # matches torch:  return (self.x1, (*dw1, *dw2))
    return x1_new, (dw_w1, dw_w3, dw_w2)


if __name__ == "__main__":
    key = jax.random.PRNGKey(0)
    B, n_in, n_h, n_out = 1, 16, 32, 24  # w1:(16,32) w2:(32,24) w3:(24,32)
    k1, k2, k3, k4 = jax.random.split(key, 4)

    # deterministic synthetic parameters (module __init__ takes w1, w2, w3)
    w1 = jax.random.normal(k1, (n_in, n_h), jnp.float32) * 0.5
    w2 = jax.random.normal(k2, (n_h, n_out), jnp.float32) * 0.5
    w3 = jax.random.normal(k3, (n_out, n_h), jnp.float32) * 0.5

    # input spikes and initial feedback state (self.x1 = zeros(1, w3.shape[0]))
    x = (jax.random.uniform(k4, (B, n_in)) > 0.5).astype(jnp.float32)
    x1 = jnp.zeros((B, n_out), jnp.float32)

    x1_new, (dw_w1, dw_w3, dw_w2) = feedback_forward(x, x1, w1, w2, w3)
    jax.block_until_ready((x1_new, dw_w1, dw_w3, dw_w2))

    # plain-JAX reference check of the same forward semantics
    i0 = x @ w1 + x1 @ w3
    s0 = (i0 >= THRESHOLD).astype(jnp.float32)
    i1 = s0 @ w2
    s1 = (i1 >= THRESHOLD).astype(jnp.float32)
    assert jnp.allclose(x1_new, s1)
    assert jnp.allclose(dw_w1, x.T @ s0)
    assert jnp.allclose(dw_w3, x1.T @ s0)
    assert jnp.allclose(dw_w2, s0.T @ s1)

    print("KERNEL_OK")
</pallas_src>

<mosaic_0001>
module attributes {stable_mosaic.version = 11 : i64} {
  func.func @feedback_kernel(%arg0: memref<1x16xf32, #tpu.memory_space<vmem>>, %arg1: memref<1x24xf32, #tpu.memory_space<vmem>>, %arg2: memref<16x32xf32, #tpu.memory_space<vmem>>, %arg3: memref<32x24xf32, #tpu.memory_space<vmem>>, %arg4: memref<24x32xf32, #tpu.memory_space<vmem>>, %arg5: memref<1x24xf32, #tpu.memory_space<vmem>>, %arg6: memref<16x32xf32, #tpu.memory_space<vmem>>, %arg7: memref<24x32xf32, #tpu.memory_space<vmem>>, %arg8: memref<32x24xf32, #tpu.memory_space<vmem>>) attributes {dimension_semantics = [], scalar_prefetch = 0 : i64, scratch_operands = 0 : i64, tpu.core_type = #tpu.core_type<tc>} {
    %c0 = arith.constant 0 : index
    %c0_0 = arith.constant 0 : index
    %0 = vector.load %arg0[%c0, %c0_0] : memref<1x16xf32, #tpu.memory_space<vmem>>, vector<1x16xf32>
    %c0_1 = arith.constant 0 : index
    %c0_2 = arith.constant 0 : index
    %1 = vector.load %arg1[%c0_1, %c0_2] : memref<1x24xf32, #tpu.memory_space<vmem>>, vector<1x24xf32>
    %c0_3 = arith.constant 0 : index
    %c0_4 = arith.constant 0 : index
    %2 = vector.load %arg2[%c0_3, %c0_4] : memref<16x32xf32, #tpu.memory_space<vmem>>, vector<16x32xf32>
    %c0_5 = arith.constant 0 : index
    %c0_6 = arith.constant 0 : index
    %3 = vector.load %arg3[%c0_5, %c0_6] : memref<32x24xf32, #tpu.memory_space<vmem>>, vector<32x24xf32>
    %c0_7 = arith.constant 0 : index
    %c0_8 = arith.constant 0 : index
    %4 = vector.load %arg4[%c0_7, %c0_8] : memref<24x32xf32, #tpu.memory_space<vmem>>, vector<24x32xf32>
    %cst = arith.constant dense<0.000000e+00> : vector<1x32xf32>
    %5 = tpu.matmul %0, %2, %cst {dimension_numbers = #tpu.dot_dimension_numbers<[1], [0], [0], [1], [0, 0, 1, 1], [], []>} : vector<1x16xf32>, vector<16x32xf32>, vector<1x32xf32> -> vector<1x32xf32>
    %cst_9 = arith.constant dense<0.000000e+00> : vector<1x32xf32>
    %6 = tpu.matmul %1, %4, %cst_9 {dimension_numbers = #tpu.dot_dimension_numbers<[1], [0], [0], [1], [0, 0, 1, 1], [], []>} : vector<1x24xf32>, vector<24x32xf32>, vector<1x32xf32> -> vector<1x32xf32>
    %7 = arith.addf %5, %6 : vector<1x32xf32>
    %cst_10 = arith.constant 5.000000e-01 : f32
    %8 = vector.broadcast %cst_10 : f32 to vector<1x32xf32>
    %9 = arith.cmpf oge, %7, %8 : vector<1x32xf32>
    %10 = arith.extui %9 : vector<1x32xi1> to vector<1x32xi32>
    %11 = arith.sitofp %10 : vector<1x32xi32> to vector<1x32xf32>
    %cst_11 = arith.constant dense<0.000000e+00> : vector<16x32xf32>
    %12 = tpu.matmul %0, %11, %cst_11 {dimension_numbers = #tpu.dot_dimension_numbers<[0], [0], [1], [1], [0, 1, 1, 1], [], []>} : vector<1x16xf32>, vector<1x32xf32>, vector<16x32xf32> -> vector<16x32xf32>
    %c0_12 = arith.constant 0 : index
    %c0_13 = arith.constant 0 : index
    %13 = vector.load %arg6[%c0_12, %c0_13] : memref<16x32xf32, #tpu.memory_space<vmem>>, vector<16x32xf32>
    tpu.vector_store %arg6[%c0_12, %c0_13], %12 {strides = array<i32>} : memref<16x32xf32, #tpu.memory_space<vmem>>, vector<16x32xf32>,
    %cst_14 = arith.constant dense<0.000000e+00> : vector<24x32xf32>
    %14 = tpu.matmul %1, %11, %cst_14 {dimension_numbers = #tpu.dot_dimension_numbers<[0], [0], [1], [1], [0, 1, 1, 1], [], []>} : vector<1x24xf32>, vector<1x32xf32>, vector<24x32xf32> -> vector<24x32xf32>
    %c0_15 = arith.constant 0 : index
    %c0_16 = arith.constant 0 : index
    %15 = vector.load %arg7[%c0_15, %c0_16] : memref<24x32xf32, #tpu.memory_space<vmem>>, vector<24x32xf32>
    tpu.vector_store %arg7[%c0_15, %c0_16], %14 {strides = array<i32>} : memref<24x32xf32, #tpu.memory_space<vmem>>, vector<24x32xf32>,
    %cst_17 = arith.constant dense<0.000000e+00> : vector<1x24xf32>
    %16 = tpu.matmul %11, %3, %cst_17 {dimension_numbers = #tpu.dot_dimension_numbers<[1], [0], [0], [1], [0, 0, 1, 1], [], []>} : vector<1x32xf32>, vector<32x24xf32>, vector<1x24xf32> -> vector<1x24xf32>
    %cst_18 = arith.constant 5.000000e-01 : f32
    %17 = vector.broadcast %cst_18 : f32 to vector<1x24xf32>
    %18 = arith.cmpf oge, %16, %17 : vector<1x24xf32>
    %19 = arith.extui %18 : vector<1x24xi1> to vector<1x24xi32>
    %20 = arith.sitofp %19 : vector<1x24xi32> to vector<1x24xf32>
    %cst_19 = arith.constant dense<0.000000e+00> : vector<32x24xf32>
    %21 = tpu.matmul %11, %20, %cst_19 {dimension_numbers = #tpu.dot_dimension_numbers<[0], [0], [1], [1], [0, 1, 1, 1], [], []>} : vector<1x32xf32>, vector<1x24xf32>, vector<32x24xf32> -> vector<32x24xf32>
    %c0_20 = arith.constant 0 : index
    %c0_21 = arith.constant 0 : index
    %22 = vector.load %arg8[%c0_20, %c0_21] : memref<32x24xf32, #tpu.memory_space<vmem>>, vector<32x24xf32>
    tpu.vector_store %arg8[%c0_20, %c0_21], %21 {strides = array<i32>} : memref<32x24xf32, #tpu.memory_space<vmem>>, vector<32x24xf32>,
    %c0_22 = arith.constant 0 : index
    %c0_23 = arith.constant 0 : index
    %23 = vector.load %arg5[%c0_22, %c0_23] : memref<1x24xf32, #tpu.memory_space<vmem>>, vector<1x24xf32>
    tpu.vector_store %arg5[%c0_22, %c0_23], %20 {strides = array<i32>} : memref<1x24xf32, #tpu.memory_space<vmem>>, vector<1x24xf32>,
    return
  }
}

</mosaic_0001>

<llo_original>
// kernel: tpu_custom_call.1
$region0: #{tpu_custom_call.1}
  #allocation0 [shape = 'u32[]', space=smem, size = 0x4, offset = 0x4, fixed_abs, tag = 'smem constant byte address 0x4 - core index']
  #allocation1 [shape = 'u32[72,128]{1,0:T(1,128)}', space=vmem, size = 0x9000, scoped, tag = 'internal scratch']
  %s0 = inlined_call_operand.vmem [shape: f32[1,16], index: 0, kind: input, shape index: {}]
  %s1 = inlined_call_operand.vmem [shape: f32[1,24], index: 1, kind: input, shape index: {}]
  %s2 = inlined_call_operand.vmem [shape: f32[16,32], index: 2, kind: input, shape index: {}]
  %s3 = inlined_call_operand.vmem [shape: f32[32,24], index: 3, kind: input, shape index: {}]
  %s4 = inlined_call_operand.vmem [shape: f32[24,32], index: 4, kind: input, shape index: {}]
  %s5 = inlined_call_operand.hbm [shape: f32[1,24], index: 5, kind: output, shape index: {0}]
  %s6 = inlined_call_operand.hbm [shape: f32[16,32], index: 6, kind: output, shape index: {1}]
  %s7 = inlined_call_operand.hbm [shape: f32[24,32], index: 7, kind: output, shape index: {2}]
  %s8 = inlined_call_operand.vmem [shape: f32[32,24], index: 8, kind: output, shape index: {3}]
  %9 = xla_tuple %s5, %s6, %s7, %s8
  %s10 = sld [smem:[#allocation0]]
  $region54: #{tpu_custom_call.1} parent=0
    _
  %s12 = ssub.s32 1, %s10
  %s13 = scalar_select 0, %s12, %s10
  $region1: #{tpu_custom_call.1} parent=0
    #allocation2 [shape = 'u8[512]{0}', space=vmem, size = 0x400, scoped, tag = 'output window, operand 0, single buffered']
    #allocation3 [shape = 's32[1]{0}', space=sflag, size = 0x4, scoped, tag = 'scoped memory for tpu_custom_call.1']
    #allocation4 [shape = 'u8[8192]{0}', space=vmem, size = 0x2000, scoped, tag = 'output window, operand 1, single buffered']
    #allocation5 [shape = 's32[1]{0}', space=sflag, size = 0x4, scoped, tag = 'scoped memory for tpu_custom_call.1']
    #allocation6 [shape = 'u8[12288]{0}', space=vmem, size = 0x3000, scoped, tag = 'output window, operand 2, single buffered']
    %14 = vsyncpa [#allocation3], 0
    %15 = vsyncpa [#allocation5], 0
    // Predicated region
    $region2: #{tpu_custom_call.1} parent=1 // pred_check
      _
    $region3: #{tpu_custom_call.1} parent=1 // pred_check_branch
      %17 = sbr.rel (0) target = $region5
    $region4: #{tpu_custom_call.1} parent=1 // pred_region
      _
    $region5: #{tpu_custom_call.1} parent=1 // pred_fallthru
      _
    // Predicated region
    $region6: #{tpu_custom_call.1} parent=1 // pred_check
      _
    $region7: #{tpu_custom_call.1} parent=1 // pred_check_branch
      %19 = sbr.rel (0) target = $region9
    $region8: #{tpu_custom_call.1} parent=1 // pred_region
      _
    $region9: #{tpu_custom_call.1} parent=1 // pred_fallthru
      _
    // Predicated region
    $region10: #{tpu_custom_call.1} parent=1 // pred_check
      _
    $region11: #{tpu_custom_call.1} parent=1 // pred_check_branch
      %21 = sbr.rel (0) target = $region13
    $region12: #{tpu_custom_call.1} parent=1 // pred_region
      _
    $region13: #{tpu_custom_call.1} parent=1 // pred_fallthru
      _
    // Predicated region
    $region14: #{tpu_custom_call.1} parent=1 // pred_check
      _
    $region15: #{tpu_custom_call.1} parent=1 // pred_check_branch
      %23 = sbr.rel (0) target = $region17
    $region16: #{tpu_custom_call.1} parent=1 // pred_region
      _
    $region17: #{tpu_custom_call.1} parent=1 // pred_fallthru
      _
    // Predicated region
    $region18: #{tpu_custom_call.1} parent=1 // pred_check
      _
    $region19: #{tpu_custom_call.1} parent=1 // pred_check_branch
      %25 = sbr.rel (0) target = $region21
    $region20: #{tpu_custom_call.1} parent=1 // pred_region
      _
    $region21: #{tpu_custom_call.1} parent=1 // pred_fallthru
      _
    %v26 = vld [vmem:[%s0] sm:$0x1]
    %v27 = vld [vmem:[%s1] sm:$0x1]
    %v28 = vld [vmem:[%s2] sm:$0xff]
    %v29 = vld [vmem:[%s2 + $0x8] sm:$0xff]
    %v30 = vld [vmem:[%s3] sm:$0xff]
    %v31 = vld [vmem:[%s3 + $0x8] sm:$0xff]
    %v32 = vld [vmem:[%s3 + $0x10] sm:$0xff]
    %v33 = vld [vmem:[%s3 + $0x18] sm:$0xff]
    %v34 = vld [vmem:[%s4] sm:$0xff]
    %v35 = vld [vmem:[%s4 + $0x8] sm:$0xff]
    %v36 = vld [vmem:[%s4 + $0x10] sm:$0xff]
    %vm37 = vcmask 195584
    %v39 = vsel %vm37, %v27, 0
    %41 = vmatpush.msra.mxu0 0.0
    %42 = vmatpush.msra.mxu0 0.0
    %43 = vmatpush.msra.mxu0 0.0
    %44 = vmatpush.msra.mxu0 0.0
    %45 = vmatpush.msra.mxu0 0.0
    %46 = vmatpush.msra.mxu0 0.0
    %47 = vmatpush.msra.mxu0 0.0
    %48 = vmatpush.msra.mxu0 0.0
    %49 = vmatpush.msra.mxu0 0.0
    %50 = vmatpush.msra.mxu0 0.0
    %51 = vmatpush.msra.mxu0 0.0
    %52 = vmatpush.msra.mxu0 0.0
    %53 = vmatpush.msra.mxu0 0.0
    %54 = vmatpush.msra.mxu0 %v36
    %55 = vmatpush.msra.mxu0 %v35
    %56 = vmatpush.msra.mxu0 %v34
    %57 = vmatmul.f32.gmra.mxu0 %v39
    %v58 = vpop.f32.mrf.mxu0
    %v59 = vadd.f32 0.0, %v58
    %60 = vdwg.mxu0
    %vm61 = vcmask 130048
    %v63 = vsel %vm61, %v26, 0
    %65 = vmatpush.msra.mxu0 0.0
    %66 = vmatpush.msra.mxu0 0.0
    %67 = vmatpush.msra.mxu0 0.0
    %68 = vmatpush.msra.mxu0 0.0
    %69 = vmatpush.msra.mxu0 0.0
    %70 = vmatpush.msra.mxu0 0.0
    %71 = vmatpush.msra.mxu0 0.0
    %72 = vmatpush.msra.mxu0 0.0
    %73 = vmatpush.msra.mxu0 0.0
    %74 = vmatpush.msra.mxu0 0.0
    %75 = vmatpush.msra.mxu0 0.0
    %76 = vmatpush.msra.mxu0 0.0
    %77 = vmatpush.msra.mxu0 0.0
    %78 = vmatpush.msra.mxu0 0.0
    %79 = vmatpush.msra.mxu0 %v29
    %80 = vmatpush.msra.mxu0 %v28
    %81 = vmatmul.f32.gmra.mxu0 %v63
    %v82 = vpop.f32.mrf.mxu0
    %v83 = vadd.f32 %v59, %v82
    %84 = vdwg.mxu0
    %vm85 = vcmp.ge.f32.partialorder %v83, 0.5
    %v86 = vsel %vm85, 1, 0
    %v87 = vcvt.s32.f32 %v86
    %88 = vxpose.xlu0.b32.start [1/16] %v26, 128
    %89 = vxpose.xlu0.b32.cont [2/16] 0.0, 128
    %90 = vxpose.xlu0.b32.cont [3/16] 0.0, 128
    %91 = vxpose.xlu0.b32.cont [4/16] 0.0, 128
    %92 = vxpose.xlu0.b32.cont [5/16] 0.0, 128
    %93 = vxpose.xlu0.b32.cont [6/16] 0.0, 128
    %94 = vxpose.xlu0.b32.cont [7/16] 0.0, 128
    %95 = vxpose.xlu0.b32.cont [8/16] 0.0, 128
    %96 = vxpose.xlu0.b32.cont [9/16] 0.0, 128
    %97 = vxpose.xlu0.b32.cont [10/16] 0.0, 128
    %98 = vxpose.xlu0.b32.cont [11/16] 0.0, 128
    %99 = vxpose.xlu0.b32.cont [12/16] 0.0, 128
    %100 = vxpose.xlu0.b32.cont [13/16] 0.0, 128
    %101 = vxpose.xlu0.b32.cont [14/16] 0.0, 128
    %102 = vxpose.xlu0.b32.cont [15/16] 0.0, 128
    %103 = vxpose.xlu0.b32.end [16/16] 0.0, 128
    %v104 = vpop.trf.xlu0
    %v105 = vpop.trf.xlu0
    %v106 = vpop.trf.xlu0
    %v107 = vpop.trf.xlu0
    %v108 = vpop.trf.xlu0
    %v109 = vpop.trf.xlu0
    %v110 = vpop.trf.xlu0
    %v111 = vpop.trf.xlu0
    %v112 = vpop.trf.xlu0
    %v113 = vpop.trf.xlu0
    %v114 = vpop.trf.xlu0
    %v115 = vpop.trf.xlu0
    %v116 = vpop.trf.xlu0
    %v117 = vpop.trf.xlu0
    %v118 = vpop.trf.xlu0
    %v119 = vpop.trf.xlu0
    %vm120 = vcmask 7168
    %v122 = vsel %vm120, %v104, 0
    %v125 = vsel %vm120, %v105, 0
    %vm127 = vcmask 1040384
    %v129 = vsel %vm127, %v87, 0
    %131 = vmatpush.msra.mxu0 0.0
    %132 = vmatpush.msra.mxu0 0.0
    %133 = vmatpush.msra.mxu0 0.0
    %134 = vmatpush.msra.mxu0 0.0
    %135 = vmatpush.msra.mxu0 0.0
    %136 = vmatpush.msra.mxu0 0.0
    %137 = vmatpush.msra.mxu0 0.0
    %138 = vmatpush.msra.mxu0 0.0
    %139 = vmatpush.msra.mxu0 0.0
    %140 = vmatpush.msra.mxu0 0.0
    %141 = vmatpush.msra.mxu0 0.0
    %142 = vmatpush.msra.mxu0 0.0
    %143 = vmatpush.msra.mxu0 0.0
    %144 = vmatpush.msra.mxu0 0.0
    %145 = vmatpush.msra.mxu0 0.0
    %146 = vmatpush.msra.mxu0 %v129
    %147 = vmatmul.f32.gmra.mxu0 %v122
    %v148 = vpop.f32.mrf.mxu0
    %v149 = vadd.f32 0.0, %v148
    %150 = vmatmul.f32.gmra.mxu0 %v125
    %v151 = vpop.f32.mrf.mxu0
    %v152 = vadd.f32 0.0, %v151
    %153 = vdwg.mxu0
    %vm154 = vcmask 261120
    %155 = vst.msk [vmem:[#allocation4] sm:$0xff] %vm154, %v149
    %156 = vst.msk [vmem:[#allocation4 + $0x8] sm:$0xff] %vm154, %v152
    %157 = vxpose.xlu0.b32.start [1/16] %v27, 128
    %158 = vxpose.xlu0.b32.cont [2/16] 0.0, 128
    %159 = vxpose.xlu0.b32.cont [3/16] 0.0, 128
    %160 = vxpose.xlu0.b32.cont [4/16] 0.0, 128
    %161 = vxpose.xlu0.b32.cont [5/16] 0.0, 128
    %162 = vxpose.xlu0.b32.cont [6/16] 0.0, 128
    %163 = vxpose.xlu0.b32.cont [7/16] 0.0, 128
    %164 = vxpose.xlu0.b32.cont [8/16] 0.0, 128
    %165 = vxpose.xlu0.b32.cont [9/16] 0.0, 128
    %166 = vxpose.xlu0.b32.cont [10/16] 0.0, 128
    %167 = vxpose.xlu0.b32.cont [11/16] 0.0, 128
    %168 = vxpose.xlu0.b32.cont [12/16] 0.0, 128
    %169 = vxpose.xlu0.b32.cont [13/16] 0.0, 128
    %170 = vxpose.xlu0.b32.cont [14/16] 0.0, 128
    %171 = vxpose.xlu0.b32.cont [15/16] 0.0, 128
    %172 = vxpose.xlu0.b32.end [16/16] 0.0, 128
    %v173 = vpop.trf.xlu0
    %v174 = vpop.trf.xlu0
    %v175 = vpop.trf.xlu0
    %v176 = vpop.trf.xlu0
    %v177 = vpop.trf.xlu0
    %v178 = vpop.trf.xlu0
    %v179 = vpop.trf.xlu0
    %v180 = vpop.trf.xlu0
    %v181 = vpop.trf.xlu0
    %v182 = vpop.trf.xlu0
    %v183 = vpop.trf.xlu0
    %v184 = vpop.trf.xlu0
    %v185 = vpop.trf.xlu0
    %v186 = vpop.trf.xlu0
    %v187 = vpop.trf.xlu0
    %v188 = vpop.trf.xlu0
    %v190 = vsel %vm120, %v173, 0
    %v193 = vsel %vm120, %v174, 0
    %v196 = vsel %vm120, %v175, 0
    %198 = vmatpush.msra.mxu0 0.0
    %199 = vmatpush.msra.mxu0 0.0
    %200 = vmatpush.msra.mxu0 0.0
    %201 = vmatpush.msra.mxu0 0.0
    %202 = vmatpush.msra.mxu0 0.0
    %203 = vmatpush.msra.mxu0 0.0
    %204 = vmatpush.msra.mxu0 0.0
    %205 = vmatpush.msra.mxu0 0.0
    %206 = vmatpush.msra.mxu0 0.0
    %207 = vmatpush.msra.mxu0 0.0
    %208 = vmatpush.msra.mxu0 0.0
    %209 = vmatpush.msra.mxu0 0.0
    %210 = vmatpush.msra.mxu0 0.0
    %211 = vmatpush.msra.mxu0 0.0
    %212 = vmatpush.msra.mxu0 0.0
    %213 = vmatpush.msra.mxu0 %v129
    %214 = vmatmul.f32.gmra.mxu0 %v190
    %v215 = vpop.f32.mrf.mxu0
    %v216 = vadd.f32 0.0, %v215
    %217 = vmatmul.f32.gmra.mxu0 %v193
    %v218 = vpop.f32.mrf.mxu0
    %v219 = vadd.f32 0.0, %v218
    %220 = vmatmul.f32.gmra.mxu0 %v196
    %v221 = vpop.f32.mrf.mxu0
    %v222 = vadd.f32 0.0, %v221
    %223 = vdwg.mxu0
    %224 = vst.msk [vmem:[#allocation6] sm:$0xff] %vm154, %v216
    %225 = vst.msk [vmem:[#allocation6 + $0x8] sm:$0xff] %vm154, %v219
    %226 = vst.msk [vmem:[#allocation6 + $0x10] sm:$0xff] %vm154, %v222
    %v227 = vsel %vm154, %v87, 0
    %229 = vmatpush.msra.mxu0 0.0
    %230 = vmatpush.msra.mxu0 0.0
    %231 = vmatpush.msra.mxu0 0.0
    %232 = vmatpush.msra.mxu0 0.0
    %233 = vmatpush.msra.mxu0 0.0
    %234 = vmatpush.msra.mxu0 0.0
    %235 = vmatpush.msra.mxu0 0.0
    %236 = vmatpush.msra.mxu0 0.0
    %237 = vmatpush.msra.mxu0 0.0
    %238 = vmatpush.msra.mxu0 0.0
    %239 = vmatpush.msra.mxu0 0.0
    %240 = vmatpush.msra.mxu0 0.0
    %241 = vmatpush.msra.mxu0 %v33
    %242 = vmatpush.msra.mxu0 %v32
    %243 = vmatpush.msra.mxu0 %v31
    %244 = vmatpush.msra.mxu0 %v30
    %245 = vmatmul.f32.gmra.mxu0 %v227
    %v246 = vpop.f32.mrf.mxu0
    %v247 = vadd.f32 0.0, %v246
    %248 = vdwg.mxu0
    %vm249 = vcmp.ge.f32.partialorder %v247, 0.5
    %v250 = vsel %vm249, 1, 0
    %v251 = vcvt.s32.f32 %v250
    %252 = vxpose.xlu0.b32.start [1/16] %v87, 128
    %253 = vxpose.xlu0.b32.cont [2/16] 0.0, 128
    %254 = vxpose.xlu0.b32.cont [3/16] 0.0, 128
    %255 = vxpose.xlu0.b32.cont [4/16] 0.0, 128
    %256 = vxpose.xlu0.b32.cont [5/16] 0.0, 128
    %257 = vxpose.xlu0.b32.cont [6/16] 0.0, 128
    %258 = vxpose.xlu0.b32.cont [7/16] 0.0, 128
    %259 = vxpose.xlu0.b32.cont [8/16] 0.0, 128
    %260 = vxpose.xlu0.b32.cont [9/16] 0.0, 128
    %261 = vxpose.xlu0.b32.cont [10/16] 0.0, 128
    %262 = vxpose.xlu0.b32.cont [11/16] 0.0, 128
    %263 = vxpose.xlu0.b32.cont [12/16] 0.0, 128
    %264 = vxpose.xlu0.b32.cont [13/16] 0.0, 128
    %265 = vxpose.xlu0.b32.cont [14/16] 0.0, 128
    %266 = vxpose.xlu0.b32.cont [15/16] 0.0, 128
    %267 = vxpose.xlu0.b32.end [16/16] 0.0, 128
    %v268 = vpop.trf.xlu0
    %v269 = vpop.trf.xlu0
    %v270 = vpop.trf.xlu0
    %v271 = vpop.trf.xlu0
    %v272 = vpop.trf.xlu0
    %v273 = vpop.trf.xlu0
    %v274 = vpop.trf.xlu0
    %v275 = vpop.trf.xlu0
    %v276 = vpop.trf.xlu0
    %v277 = vpop.trf.xlu0
    %v278 = vpop.trf.xlu0
    %v279 = vpop.trf.xlu0
    %v280 = vpop.trf.xlu0
    %v281 = vpop.trf.xlu0
    %v282 = vpop.trf.xlu0
    %v283 = vpop.trf.xlu0
    %v285 = vsel %vm120, %v268, 0
    %v288 = vsel %vm120, %v269, 0
    %v291 = vsel %vm120, %v270, 0
    %v294 = vsel %vm120, %v271, 0
    %v297 = vsel %vm127, %v251, 0
    %299 = vmatpush.msra.mxu0 0.0
    %300 = vmatpush.msra.mxu0 0.0
    %301 = vmatpush.msra.mxu0 0.0
    %302 = vmatpush.msra.mxu0 0.0
    %303 = vmatpush.msra.mxu0 0.0
    %304 = vmatpush.msra.mxu0 0.0
    %305 = vmatpush.msra.mxu0 0.0
    %306 = vmatpush.msra.mxu0 0.0
    %307 = vmatpush.msra.mxu0 0.0
    %308 = vmatpush.msra.mxu0 0.0
    %309 = vmatpush.msra.mxu0 0.0
    %310 = vmatpush.msra.mxu0 0.0
    %311 = vmatpush.msra.mxu0 0.0
    %312 = vmatpush.msra.mxu0 0.0
    %313 = vmatpush.msra.mxu0 0.0
    %314 = vmatpush.msra.mxu0 %v297
    %315 = vmatmul.f32.gmra.mxu0 %v285
    %v316 = vpop.f32.mrf.mxu0
    %v317 = vadd.f32 0.0, %v316
    %318 = vmatmul.f32.gmra.mxu0 %v288
    %v319 = vpop.f32.mrf.mxu0
    %v320 = vadd.f32 0.0, %v319
    %321 = vmatmul.f32.gmra.mxu0 %v291
    %v322 = vpop.f32.mrf.mxu0
    %v323 = vadd.f32 0.0, %v322
    %324 = vmatmul.f32.gmra.mxu0 %v294
    %v325 = vpop.f32.mrf.mxu0
    %v326 = vadd.f32 0.0, %v325
    %327 = vdwg.mxu0
    %328 = vst.msk [vmem:[%s8] sm:$0xff] %vm37, %v317
    %329 = vst.msk [vmem:[%s8 + $0x8] sm:$0xff] %vm37, %v320
    %330 = vst.msk [vmem:[%s8 + $0x10] sm:$0xff] %vm37, %v323
    %331 = vst.msk [vmem:[%s8 + $0x18] sm:$0xff] %vm37, %v326
    %vm332 = vcmask 188416
    %333 = vst.msk [vmem:[#allocation2] sm:$0x1] %vm332, %v251
    // Predicated region
    $region22: #{tpu_custom_call.1} parent=1 // pred_check
      _
    $region23: #{tpu_custom_call.1} parent=1 // pred_check_branch
      %335 = sbr.rel (0) target = $region25
    $region24: #{tpu_custom_call.1} parent=1 // pred_region
      %337 = vsyncadd [#allocation3], 0
      %s339 = sshll.u32 [#allocation2], 4
      %s340 = int_to_ptr.vmem [resolvable:$true] %s339
      %s341 = sshll.u32 %s5, 4
      %s342 = int_to_ptr.hbm [resolvable:$true] %s341
      %344 = dma.vmem_to_hbm [thread:$0]  %s340, 16, %s342, [#allocation3]
    $region25: #{tpu_custom_call.1} parent=1 // pred_fallthru
      _
    // Predicated region
    $region26: #{tpu_custom_call.1} parent=1 // pred_check
      _
    $region27: #{tpu_custom_call.1} parent=1 // pred_check_branch
      %346 = sbr.rel (0) target = $region29
    $region28: #{tpu_custom_call.1} parent=1 // pred_region
      %348 = vsyncadd [#allocation5], 0
      %s349 = sshll.u32 [#allocation4], 4
      %s350 = int_to_ptr.vmem [resolvable:$true] %s349
      %s351 = sshll.u32 %s6, 4
      %s352 = int_to_ptr.hbm [resolvable:$true] %s351
      %357 = dma.vmem_to_hbm [thread:$0]  %s350, 256, %s352, [#allocation5], 128, 128, 8
    $region29: #{tpu_custom_call.1} parent=1 // pred_fallthru
      _
    // Predicated region
    $region30: #{tpu_custom_call.1} parent=1 // pred_check
      _
    $region31: #{tpu_custom_call.1} parent=1 // pred_check_branch
      %359 = sbr.rel (0) target = $region33
    $region32: #{tpu_custom_call.1} parent=1 // pred_region
      %361 = vsyncadd [#allocation5], 0
      %s362 = sshll.u32 [#allocation6], 4
      %s363 = int_to_ptr.vmem [resolvable:$true] %s362
      %s364 = sshll.u32 %s7, 4
      %s365 = int_to_ptr.hbm [resolvable:$true] %s364
      %370 = dma.vmem_to_hbm [thread:$0]  %s363, 384, %s365, [#allocation5], 128, 128, 8
    $region33: #{tpu_custom_call.1} parent=1 // pred_fallthru
      _
    // Predicated region
    $region34: #{tpu_custom_call.1} parent=1 // pred_check
      _
    $region35: #{tpu_custom_call.1} parent=1 // pred_check_branch
      %372 = sbr.rel (0) target = $region37
    $region36: #{tpu_custom_call.1} parent=1 // pred_region
      _
    $region37: #{tpu_custom_call.1} parent=1 // pred_fallthru
      _
    // Predicated region
    $region38: #{tpu_custom_call.1} parent=1 // pred_check
      _
    $region39: #{tpu_custom_call.1} parent=1 // pred_check_branch
      %374 = sbr.rel (0) target = $region41
    $region40: #{tpu_custom_call.1} parent=1 // pred_region
      %376 = dma.done [#allocation3], 16
    $region41: #{tpu_custom_call.1} parent=1 // pred_fallthru
      _
    // Predicated region
    $region42: #{tpu_custom_call.1} parent=1 // pred_check
      _
    $region43: #{tpu_custom_call.1} parent=1 // pred_check_branch
      %378 = sbr.rel (0) target = $region45
    $region44: #{tpu_custom_call.1} parent=1 // pred_region
      %380 = dma.done [#allocation5], 256
    $region45: #{tpu_custom_call.1} parent=1 // pred_fallthru
      _
    // Predicated region
    $region46: #{tpu_custom_call.1} parent=1 // pred_check
      _
    $region47: #{tpu_custom_call.1} parent=1 // pred_check_branch
      %382 = sbr.rel (0) target = $region49
    $region48: #{tpu_custom_call.1} parent=1 // pred_region
      %384 = dma.done [#allocation5], 384
    $region49: #{tpu_custom_call.1} parent=1 // pred_fallthru
      _
    // Predicated region
    $region50: #{tpu_custom_call.1} parent=1 // pred_check
      _
    $region51: #{tpu_custom_call.1} parent=1 // pred_check_branch
      %386 = sbr.rel (0) target = $region53
    $region52: #{tpu_custom_call.1} parent=1 // pred_region
      _
    $region53: #{tpu_custom_call.1} parent=1 // pred_fallthru
      _
    %387 = vsyncpa [#allocation3], 1
    %388 = vsyncpa [#allocation5], 1

</llo_original>
